<compile_context>
chip_gen: v5e
topology: v5e:2x2
jax: 0.10.0
libtpu: 0.0.40
codegen_flags: <defaults>
</compile_context>

<pallas_src>
import jax
import jax.numpy as jnp
from jax.experimental import pallas as pl
from jax.experimental.pallas import tpu as pltpu


def rnn_kernel(x_ref,        # (T, Bp, 128)  padded, time-major input
               w_ih0_ref,    # (128, H)      layer-0 input weights^T, rows zero-padded
               b0_ref,       # (1, H)        b_ih0 + b_hh0
               w_hh0_ref,    # (H, H)        layer-0 recurrent weights^T
               w_ih1_ref,    # (H, H)        layer-1 input weights^T
               w_hh1_ref,    # (H, H)        layer-1 recurrent weights^T
               b1_ref,       # (1, H)        b_ih1 + b_hh1
               w_fc_ref,     # (H, 128)      fc weights^T, lane-padded
               b_fc_ref,     # (1, 128)      fc bias, pad cols = -1e30
               out_ref,      # (Bp, 128)     lane-dense log-probs
               xproj_ref):   # (T, Bp, H)    VMEM scratch: hoisted layer-0 projection
    T = x_ref.shape[0]
    Bp = x_ref.shape[1]
    H = w_hh0_ref.shape[1]

    # ---- Hoisted layer-0 input projection (off the serial critical path) ----
    # One well-utilized M = T*Bp matmul instead of T tiny M = Bp matmuls, with
    # the combined layer-0 bias folded in once.
    x_all = x_ref[...].reshape(T * Bp, x_ref.shape[2])             # (T*Bp, 128)
    xp = jnp.dot(x_all, w_ih0_ref[...],
                 preferred_element_type=jnp.float32) + b0_ref[...]  # (T*Bp, H)
    xproj_ref[...] = xp.reshape(T, Bp, H)

    # Load recurrent weights ONCE (kept live across all unrolled steps).
    w_hh0 = w_hh0_ref[...]
    w_ih1 = w_ih1_ref[...]
    w_hh1 = w_hh1_ref[...]
    b1 = b1_ref[...]                                                # (1, H)

    def step(t, carry):
        h0, h1 = carry
        # layer 0: only the K=128 recurrent dot is on the serial chain now.
        h0n = jnp.tanh(
            xproj_ref[t]
            + jnp.dot(h0, w_hh0, preferred_element_type=jnp.float32))
        # layer 1: two independent K=128 dots (no concat materialization).
        h1n = jnp.tanh(
            jnp.dot(h0n, w_ih1, preferred_element_type=jnp.float32)
            + jnp.dot(h1, w_hh1, preferred_element_type=jnp.float32)
            + b1)
        return h0n, h1n

    h0 = jnp.zeros((Bp, H), jnp.float32)   # h_0 = zeros (matches torch.zeros)
    h1 = jnp.zeros((Bp, H), jnp.float32)
    # TODO(synk): cap the unroll (e.g. unroll=8) if T ever grows large.
    h0, h1 = jax.lax.fori_loop(0, T, step, (h0, h1), unroll=True)

    # fc + log_softmax over a lane-dense (Bp, 128) block; padded columns carry
    # bias -1e30 so they contribute exp(.) == 0 to the normalizer.
    logits = (jnp.dot(h1, w_fc_ref[...], preferred_element_type=jnp.float32)
              + b_fc_ref[...])
    m = jnp.max(logits, axis=1, keepdims=True)
    s = logits - m
    lse = jnp.log(jnp.sum(jnp.exp(s), axis=1, keepdims=True))
    out_ref[...] = s - lse


def rnn_forward(x, params):
    """x: (B, T, input_size) float32 -> (B, num_classes) log-probs."""
    B, T, Din = x.shape
    H = params["w_hh_l0"].shape[0]
    C = params["w_fc"].shape[0]

    Din_p = 128                                  # pad contraction to full lane width
    Bp = max(((B + 7) // 8) * 8, 8)              # pad batch to full sublanes
    Cp = 128                                     # lane-dense output block

    # Time-major, zero-pad batch and feature dims.
    x_tm = jnp.transpose(x, (1, 0, 2))                             # (T, B, Din)
    x_tm = jnp.pad(x_tm, ((0, 0), (0, Bp - B), (0, Din_p - Din)))  # (T, Bp, 128)

    # Layer 0: input weights^T zero-padded along the Din axis, combined bias.
    w_ih0 = jnp.pad(params["w_ih_l0"].T, ((0, Din_p - Din), (0, 0)))  # (128, H)
    b0 = (params["b_ih_l0"] + params["b_hh_l0"]).reshape(1, H)
    w_hh0 = params["w_hh_l0"].T                                       # (H, H)

    # Layer 1 weights^T and combined bias.
    w_ih1 = params["w_ih_l1"].T                                       # (H, H)
    w_hh1 = params["w_hh_l1"].T                                       # (H, H)
    b1 = (params["b_ih_l1"] + params["b_hh_l1"]).reshape(1, H)

    # fc weights/bias padded to 128 lanes; padded bias columns -> -1e30 so they
    # vanish under log-softmax.
    w_fc = jnp.pad(params["w_fc"].T, ((0, 0), (0, Cp - C)))           # (H, 128)
    b_fc = jnp.pad(params["b_fc"], (0, Cp - C)).reshape(1, Cp)
    col = jnp.arange(Cp)[None, :]
    b_fc = jnp.where(col < C, b_fc, jnp.float32(-1e30))

    vmem = pl.BlockSpec(memory_space=pltpu.MemorySpace.VMEM)
    out = pl.pallas_call(
        rnn_kernel,
        out_shape=jax.ShapeDtypeStruct((Bp, Cp), jnp.float32),
        in_specs=[vmem] * 9,                     # single invocation, all in VMEM
        out_specs=vmem,
        scratch_shapes=[pltpu.VMEM((T, Bp, H), jnp.float32)],   # hoisted x-projection
    )(x_tm, w_ih0, b0, w_hh0, w_ih1, w_hh1, b1, w_fc, b_fc)

    return out[:B, :C]


def rnn_reference(x, params):
    """Pure-JAX reference mirroring torch nn.RNN(tanh, 2 layers) + fc + log_softmax."""
    B, T, _ = x.shape
    H = params["w_hh_l0"].shape[0]
    h0 = jnp.zeros((B, H), jnp.float32)
    h1 = jnp.zeros((B, H), jnp.float32)
    for t in range(T):
        xt = x[:, t, :]
        h0 = jnp.tanh(xt @ params["w_ih_l0"].T + params["b_ih_l0"]
                      + h0 @ params["w_hh_l0"].T + params["b_hh_l0"])
        h1 = jnp.tanh(h0 @ params["w_ih_l1"].T + params["b_ih_l1"]
                      + h1 @ params["w_hh_l1"].T + params["b_hh_l1"])
    logits = h1 @ params["w_fc"].T + params["b_fc"]
    return jax.nn.log_softmax(logits, axis=1)


def init_params(key, input_size, hidden_size, num_classes):
    ks = jax.random.split(key, 10)
    u = lambda k, shape, bound: jax.random.uniform(k, shape, jnp.float32, -bound, bound)
    kh = 1.0 / jnp.sqrt(hidden_size)
    return {
        "w_ih_l0": u(ks[0], (hidden_size, input_size), kh),
        "w_hh_l0": u(ks[1], (hidden_size, hidden_size), kh),
        "b_ih_l0": u(ks[2], (hidden_size,), kh),
        "b_hh_l0": u(ks[3], (hidden_size,), kh),
        "w_ih_l1": u(ks[4], (hidden_size, hidden_size), kh),
        "w_hh_l1": u(ks[5], (hidden_size, hidden_size), kh),
        "b_ih_l1": u(ks[6], (hidden_size,), kh),
        "b_hh_l1": u(ks[7], (hidden_size,), kh),
        "w_fc":    u(ks[8], (num_classes, hidden_size), kh),
        "b_fc":    u(ks[9], (num_classes,), kh),
    }


if __name__ == "__main__":
    input_size = 98      # from module
    hidden_size = 128    # from module
    num_classes = 5      # from module
    batch = 4            # small
    seq_len = 8          # small

    key = jax.random.PRNGKey(0)
    kx, kp = jax.random.split(key)
    x = jax.random.normal(kx, (batch, seq_len, input_size), jnp.float32)
    params = init_params(kp, input_size, hidden_size, num_classes)

    out = jax.block_until_ready(rnn_forward(x, params))
    ref = rnn_reference(x, params)

    assert out.shape == (batch, num_classes)
    assert jnp.allclose(out, ref, atol=2e-5, rtol=2e-5), "mismatch vs JAX reference"
    print("KERNEL_OK")
</pallas_src>

<mosaic_0001>
module attributes {stable_mosaic.version = 11 : i64} {
  func.func @rnn_kernel(%arg0: memref<8x8x128xf32, #tpu.memory_space<vmem>>, %arg1: memref<128x128xf32, #tpu.memory_space<vmem>>, %arg2: memref<1x128xf32, #tpu.memory_space<vmem>>, %arg3: memref<128x128xf32, #tpu.memory_space<vmem>>, %arg4: memref<128x128xf32, #tpu.memory_space<vmem>>, %arg5: memref<128x128xf32, #tpu.memory_space<vmem>>, %arg6: memref<1x128xf32, #tpu.memory_space<vmem>>, %arg7: memref<128x128xf32, #tpu.memory_space<vmem>>, %arg8: memref<1x128xf32, #tpu.memory_space<vmem>>, %arg9: memref<8x128xf32, #tpu.memory_space<vmem>>, %arg10: memref<8x8x128xf32, #tpu.memory_space<vmem>>) attributes {dimension_semantics = [], scalar_prefetch = 0 : i64, scratch_operands = 1 : i64, tpu.core_type = #tpu.core_type<tc>} {
    %c0 = arith.constant 0 : index
    %c0_0 = arith.constant 0 : index
    %c0_1 = arith.constant 0 : index
    %0 = vector.load %arg0[%c0, %c0_0, %c0_1] : memref<8x8x128xf32, #tpu.memory_space<vmem>>, vector<8x8x128xf32>
    %1 = vector.shape_cast %0 : vector<8x8x128xf32> to vector<64x128xf32>
    %c0_2 = arith.constant 0 : index
    %c0_3 = arith.constant 0 : index
    %2 = vector.load %arg1[%c0_2, %c0_3] : memref<128x128xf32, #tpu.memory_space<vmem>>, vector<128x128xf32>
    %cst = arith.constant dense<0.000000e+00> : vector<64x128xf32>
    %3 = tpu.matmul %1, %2, %cst {dimension_numbers = #tpu.dot_dimension_numbers<[1], [0], [0], [1], [0, 0, 1, 1], [], []>} : vector<64x128xf32>, vector<128x128xf32>, vector<64x128xf32> -> vector<64x128xf32>
    %c0_4 = arith.constant 0 : index
    %c0_5 = arith.constant 0 : index
    %4 = vector.load %arg2[%c0_4, %c0_5] : memref<1x128xf32, #tpu.memory_space<vmem>>, vector<1x128xf32>
    %5 = vector.broadcast %4 : vector<1x128xf32> to vector<64x128xf32>
    %6 = arith.addf %3, %5 : vector<64x128xf32>
    %7 = vector.shape_cast %6 : vector<64x128xf32> to vector<8x8x128xf32>
    %c0_6 = arith.constant 0 : index
    %c0_7 = arith.constant 0 : index
    %c0_8 = arith.constant 0 : index
    %8 = vector.load %arg10[%c0_6, %c0_7, %c0_8] : memref<8x8x128xf32, #tpu.memory_space<vmem>>, vector<8x8x128xf32>
    tpu.vector_store %arg10[%c0_6, %c0_7, %c0_8], %7 {strides = array<i32>} : memref<8x8x128xf32, #tpu.memory_space<vmem>>, vector<8x8x128xf32>,
    %c0_9 = arith.constant 0 : index
    %c0_10 = arith.constant 0 : index
    %9 = vector.load %arg3[%c0_9, %c0_10] : memref<128x128xf32, #tpu.memory_space<vmem>>, vector<128x128xf32>
    %c0_11 = arith.constant 0 : index
    %c0_12 = arith.constant 0 : index
    %10 = vector.load %arg4[%c0_11, %c0_12] : memref<128x128xf32, #tpu.memory_space<vmem>>, vector<128x128xf32>
    %c0_13 = arith.constant 0 : index
    %c0_14 = arith.constant 0 : index
    %11 = vector.load %arg5[%c0_13, %c0_14] : memref<128x128xf32, #tpu.memory_space<vmem>>, vector<128x128xf32>
    %c0_15 = arith.constant 0 : index
    %c0_16 = arith.constant 0 : index
    %12 = vector.load %arg6[%c0_15, %c0_16] : memref<1x128xf32, #tpu.memory_space<vmem>>, vector<1x128xf32>
    %cst_17 = arith.constant 0.000000e+00 : f32
    %13 = vector.broadcast %cst_17 : f32 to vector<8x128xf32>
    %cst_18 = arith.constant 0.000000e+00 : f32
    %14 = vector.broadcast %cst_18 : f32 to vector<8x128xf32>
    %c0_i32 = arith.constant 0 : i32
    %15 = arith.index_cast %c0_i32 : i32 to index
    %c0_19 = arith.constant 0 : index
    %c0_20 = arith.constant 0 : index
    %16 = vector.load %arg10[%15, %c0_19, %c0_20] : memref<8x8x128xf32, #tpu.memory_space<vmem>>, vector<1x8x128xf32>
    %17 = vector.shape_cast %16 : vector<1x8x128xf32> to vector<8x128xf32>
    %cst_21 = arith.constant dense<0.000000e+00> : vector<8x128xf32>
    %18 = tpu.matmul %13, %9, %cst_21 {dimension_numbers = #tpu.dot_dimension_numbers<[1], [0], [0], [1], [0, 0, 1, 1], [], []>} : vector<8x128xf32>, vector<128x128xf32>, vector<8x128xf32> -> vector<8x128xf32>
    %19 = arith.addf %17, %18 : vector<8x128xf32>
    %20 = math.tanh %19 : vector<8x128xf32>
    %cst_22 = arith.constant dense<0.000000e+00> : vector<8x128xf32>
    %21 = tpu.matmul %20, %10, %cst_22 {dimension_numbers = #tpu.dot_dimension_numbers<[1], [0], [0], [1], [0, 0, 1, 1], [], []>} : vector<8x128xf32>, vector<128x128xf32>, vector<8x128xf32> -> vector<8x128xf32>
    %cst_23 = arith.constant dense<0.000000e+00> : vector<8x128xf32>
    %22 = tpu.matmul %14, %11, %cst_23 {dimension_numbers = #tpu.dot_dimension_numbers<[1], [0], [0], [1], [0, 0, 1, 1], [], []>} : vector<8x128xf32>, vector<128x128xf32>, vector<8x128xf32> -> vector<8x128xf32>
    %23 = arith.addf %21, %22 : vector<8x128xf32>
    %24 = vector.broadcast %12 : vector<1x128xf32> to vector<8x128xf32>
    %25 = arith.addf %23, %24 : vector<8x128xf32>
    %26 = math.tanh %25 : vector<8x128xf32>
    %c1_i32 = arith.constant 1 : i32
    %27 = arith.index_cast %c1_i32 : i32 to index
    %c0_24 = arith.constant 0 : index
    %c0_25 = arith.constant 0 : index
    %28 = vector.load %arg10[%27, %c0_24, %c0_25] : memref<8x8x128xf32, #tpu.memory_space<vmem>>, vector<1x8x128xf32>
    %29 = vector.shape_cast %28 : vector<1x8x128xf32> to vector<8x128xf32>
    %cst_26 = arith.constant dense<0.000000e+00> : vector<8x128xf32>
    %30 = tpu.matmul %20, %9, %cst_26 {dimension_numbers = #tpu.dot_dimension_numbers<[1], [0], [0], [1], [0, 0, 1, 1], [], []>} : vector<8x128xf32>, vector<128x128xf32>, vector<8x128xf32> -> vector<8x128xf32>
    %31 = arith.addf %29, %30 : vector<8x128xf32>
    %32 = math.tanh %31 : vector<8x128xf32>
    %cst_27 = arith.constant dense<0.000000e+00> : vector<8x128xf32>
    %33 = tpu.matmul %32, %10, %cst_27 {dimension_numbers = #tpu.dot_dimension_numbers<[1], [0], [0], [1], [0, 0, 1, 1], [], []>} : vector<8x128xf32>, vector<128x128xf32>, vector<8x128xf32> -> vector<8x128xf32>
    %cst_28 = arith.constant dense<0.000000e+00> : vector<8x128xf32>
    %34 = tpu.matmul %26, %11, %cst_28 {dimension_numbers = #tpu.dot_dimension_numbers<[1], [0], [0], [1], [0, 0, 1, 1], [], []>} : vector<8x128xf32>, vector<128x128xf32>, vector<8x128xf32> -> vector<8x128xf32>
    %35 = arith.addf %33, %34 : vector<8x128xf32>
    %36 = vector.broadcast %12 : vector<1x128xf32> to vector<8x128xf32>
    %37 = arith.addf %35, %36 : vector<8x128xf32>
    %38 = math.tanh %37 : vector<8x128xf32>
    %c2_i32 = arith.constant 2 : i32
    %39 = arith.index_cast %c2_i32 : i32 to index
    %c0_29 = arith.constant 0 : index
    %c0_30 = arith.constant 0 : index
    %40 = vector.load %arg10[%39, %c0_29, %c0_30] : memref<8x8x128xf32, #tpu.memory_space<vmem>>, vector<1x8x128xf32>
    %41 = vector.shape_cast %40 : vector<1x8x128xf32> to vector<8x128xf32>
    %cst_31 = arith.constant dense<0.000000e+00> : vector<8x128xf32>
    %42 = tpu.matmul %32, %9, %cst_31 {dimension_numbers = #tpu.dot_dimension_numbers<[1], [0], [0], [1], [0, 0, 1, 1], [], []>} : vector<8x128xf32>, vector<128x128xf32>, vector<8x128xf32> -> vector<8x128xf32>
    %43 = arith.addf %41, %42 : vector<8x128xf32>
    %44 = math.tanh %43 : vector<8x128xf32>
    %cst_32 = arith.constant dense<0.000000e+00> : vector<8x128xf32>
    %45 = tpu.matmul %44, %10, %cst_32 {dimension_numbers = #tpu.dot_dimension_numbers<[1], [0], [0], [1], [0, 0, 1, 1], [], []>} : vector<8x128xf32>, vector<128x128xf32>, vector<8x128xf32> -> vector<8x128xf32>
    %cst_33 = arith.constant dense<0.000000e+00> : vector<8x128xf32>
    %46 = tpu.matmul %38, %11, %cst_33 {dimension_numbers = #tpu.dot_dimension_numbers<[1], [0], [0], [1], [0, 0, 1, 1], [], []>} : vector<8x128xf32>, vector<128x128xf32>, vector<8x128xf32> -> vector<8x128xf32>
    %47 = arith.addf %45, %46 : vector<8x128xf32>
    %48 = vector.broadcast %12 : vector<1x128xf32> to vector<8x128xf32>
    %49 = arith.addf %47, %48 : vector<8x128xf32>
    %50 = math.tanh %49 : vector<8x128xf32>
    %c3_i32 = arith.constant 3 : i32
    %51 = arith.index_cast %c3_i32 : i32 to index
    %c0_34 = arith.constant 0 : index
    %c0_35 = arith.constant 0 : index
    %52 = vector.load %arg10[%51, %c0_34, %c0_35] : memref<8x8x128xf32, #tpu.memory_space<vmem>>, vector<1x8x128xf32>
    %53 = vector.shape_cast %52 : vector<1x8x128xf32> to vector<8x128xf32>
    %cst_36 = arith.constant dense<0.000000e+00> : vector<8x128xf32>
    %54 = tpu.matmul %44, %9, %cst_36 {dimension_numbers = #tpu.dot_dimension_numbers<[1], [0], [0], [1], [0, 0, 1, 1], [], []>} : vector<8x128xf32>, vector<128x128xf32>, vector<8x128xf32> -> vector<8x128xf32>
    %55 = arith.addf %53, %54 : vector<8x128xf32>
    %56 = math.tanh %55 : vector<8x128xf32>
    %cst_37 = arith.constant dense<0.000000e+00> : vector<8x128xf32>
    %57 = tpu.matmul %56, %10, %cst_37 {dimension_numbers = #tpu.dot_dimension_numbers<[1], [0], [0], [1], [0, 0, 1, 1], [], []>} : vector<8x128xf32>, vector<128x128xf32>, vector<8x128xf32> -> vector<8x128xf32>
    %cst_38 = arith.constant dense<0.000000e+00> : vector<8x128xf32>
    %58 = tpu.matmul %50, %11, %cst_38 {dimension_numbers = #tpu.dot_dimension_numbers<[1], [0], [0], [1], [0, 0, 1, 1], [], []>} : vector<8x128xf32>, vector<128x128xf32>, vector<8x128xf32> -> vector<8x128xf32>
    %59 = arith.addf %57, %58 : vector<8x128xf32>
    %60 = vector.broadcast %12 : vector<1x128xf32> to vector<8x128xf32>
    %61 = arith.addf %59, %60 : vector<8x128xf32>
    %62 = math.tanh %61 : vector<8x128xf32>
    %c4_i32 = arith.constant 4 : i32
    %63 = arith.index_cast %c4_i32 : i32 to index
    %c0_39 = arith.constant 0 : index
    %c0_40 = arith.constant 0 : index
    %64 = vector.load %arg10[%63, %c0_39, %c0_40] : memref<8x8x128xf32, #tpu.memory_space<vmem>>, vector<1x8x128xf32>
    %65 = vector.shape_cast %64 : vector<1x8x128xf32> to vector<8x128xf32>
    %cst_41 = arith.constant dense<0.000000e+00> : vector<8x128xf32>
    %66 = tpu.matmul %56, %9, %cst_41 {dimension_numbers = #tpu.dot_dimension_numbers<[1], [0], [0], [1], [0, 0, 1, 1], [], []>} : vector<8x128xf32>, vector<128x128xf32>, vector<8x128xf32> -> vector<8x128xf32>
    %67 = arith.addf %65, %66 : vector<8x128xf32>
    %68 = math.tanh %67 : vector<8x128xf32>
    %cst_42 = arith.constant dense<0.000000e+00> : vector<8x128xf32>
    %69 = tpu.matmul %68, %10, %cst_42 {dimension_numbers = #tpu.dot_dimension_numbers<[1], [0], [0], [1], [0, 0, 1, 1], [], []>} : vector<8x128xf32>, vector<128x128xf32>, vector<8x128xf32> -> vector<8x128xf32>
    %cst_43 = arith.constant dense<0.000000e+00> : vector<8x128xf32>
    %70 = tpu.matmul %62, %11, %cst_43 {dimension_numbers = #tpu.dot_dimension_numbers<[1], [0], [0], [1], [0, 0, 1, 1], [], []>} : vector<8x128xf32>, vector<128x128xf32>, vector<8x128xf32> -> vector<8x128xf32>
    %71 = arith.addf %69, %70 : vector<8x128xf32>
    %72 = vector.broadcast %12 : vector<1x128xf32> to vector<8x128xf32>
    %73 = arith.addf %71, %72 : vector<8x128xf32>
    %74 = math.tanh %73 : vector<8x128xf32>
    %c5_i32 = arith.constant 5 : i32
    %75 = arith.index_cast %c5_i32 : i32 to index
    %c0_44 = arith.constant 0 : index
    %c0_45 = arith.constant 0 : index
    %76 = vector.load %arg10[%75, %c0_44, %c0_45] : memref<8x8x128xf32, #tpu.memory_space<vmem>>, vector<1x8x128xf32>
    %77 = vector.shape_cast %76 : vector<1x8x128xf32> to vector<8x128xf32>
    %cst_46 = arith.constant dense<0.000000e+00> : vector<8x128xf32>
    %78 = tpu.matmul %68, %9, %cst_46 {dimension_numbers = #tpu.dot_dimension_numbers<[1], [0], [0], [1], [0, 0, 1, 1], [], []>} : vector<8x128xf32>, vector<128x128xf32>, vector<8x128xf32> -> vector<8x128xf32>
    %79 = arith.addf %77, %78 : vector<8x128xf32>
    %80 = math.tanh %79 : vector<8x128xf32>
    %cst_47 = arith.constant dense<0.000000e+00> : vector<8x128xf32>
    %81 = tpu.matmul %80, %10, %cst_47 {dimension_numbers = #tpu.dot_dimension_numbers<[1], [0], [0], [1], [0, 0, 1, 1], [], []>} : vector<8x128xf32>, vector<128x128xf32>, vector<8x128xf32> -> vector<8x128xf32>
    %cst_48 = arith.constant dense<0.000000e+00> : vector<8x128xf32>
    %82 = tpu.matmul %74, %11, %cst_48 {dimension_numbers = #tpu.dot_dimension_numbers<[1], [0], [0], [1], [0, 0, 1, 1], [], []>} : vector<8x128xf32>, vector<128x128xf32>, vector<8x128xf32> -> vector<8x128xf32>
    %83 = arith.addf %81, %82 : vector<8x128xf32>
    %84 = vector.broadcast %12 : vector<1x128xf32> to vector<8x128xf32>
    %85 = arith.addf %83, %84 : vector<8x128xf32>
    %86 = math.tanh %85 : vector<8x128xf32>
    %c6_i32 = arith.constant 6 : i32
    %87 = arith.index_cast %c6_i32 : i32 to index
    %c0_49 = arith.constant 0 : index
    %c0_50 = arith.constant 0 : index
    %88 = vector.load %arg10[%87, %c0_49, %c0_50] : memref<8x8x128xf32, #tpu.memory_space<vmem>>, vector<1x8x128xf32>
    %89 = vector.shape_cast %88 : vector<1x8x128xf32> to vector<8x128xf32>
    %cst_51 = arith.constant dense<0.000000e+00> : vector<8x128xf32>
    %90 = tpu.matmul %80, %9, %cst_51 {dimension_numbers = #tpu.dot_dimension_numbers<[1], [0], [0], [1], [0, 0, 1, 1], [], []>} : vector<8x128xf32>, vector<128x128xf32>, vector<8x128xf32> -> vector<8x128xf32>
    %91 = arith.addf %89, %90 : vector<8x128xf32>
    %92 = math.tanh %91 : vector<8x128xf32>
    %cst_52 = arith.constant dense<0.000000e+00> : vector<8x128xf32>
    %93 = tpu.matmul %92, %10, %cst_52 {dimension_numbers = #tpu.dot_dimension_numbers<[1], [0], [0], [1], [0, 0, 1, 1], [], []>} : vector<8x128xf32>, vector<128x128xf32>, vector<8x128xf32> -> vector<8x128xf32>
    %cst_53 = arith.constant dense<0.000000e+00> : vector<8x128xf32>
    %94 = tpu.matmul %86, %11, %cst_53 {dimension_numbers = #tpu.dot_dimension_numbers<[1], [0], [0], [1], [0, 0, 1, 1], [], []>} : vector<8x128xf32>, vector<128x128xf32>, vector<8x128xf32> -> vector<8x128xf32>
    %95 = arith.addf %93, %94 : vector<8x128xf32>
    %96 = vector.broadcast %12 : vector<1x128xf32> to vector<8x128xf32>
    %97 = arith.addf %95, %96 : vector<8x128xf32>
    %98 = math.tanh %97 : vector<8x128xf32>
    %c7_i32 = arith.constant 7 : i32
    %99 = arith.index_cast %c7_i32 : i32 to index
    %c0_54 = arith.constant 0 : index
    %c0_55 = arith.constant 0 : index
    %100 = vector.load %arg10[%99, %c0_54, %c0_55] : memref<8x8x128xf32, #tpu.memory_space<vmem>>, vector<1x8x128xf32>
    %101 = vector.shape_cast %100 : vector<1x8x128xf32> to vector<8x128xf32>
    %cst_56 = arith.constant dense<0.000000e+00> : vector<8x128xf32>
    %102 = tpu.matmul %92, %9, %cst_56 {dimension_numbers = #tpu.dot_dimension_numbers<[1], [0], [0], [1], [0, 0, 1, 1], [], []>} : vector<8x128xf32>, vector<128x128xf32>, vector<8x128xf32> -> vector<8x128xf32>
    %103 = arith.addf %101, %102 : vector<8x128xf32>
    %104 = math.tanh %103 : vector<8x128xf32>
    %cst_57 = arith.constant dense<0.000000e+00> : vector<8x128xf32>
    %105 = tpu.matmul %104, %10, %cst_57 {dimension_numbers = #tpu.dot_dimension_numbers<[1], [0], [0], [1], [0, 0, 1, 1], [], []>} : vector<8x128xf32>, vector<128x128xf32>, vector<8x128xf32> -> vector<8x128xf32>
    %cst_58 = arith.constant dense<0.000000e+00> : vector<8x128xf32>
    %106 = tpu.matmul %98, %11, %cst_58 {dimension_numbers = #tpu.dot_dimension_numbers<[1], [0], [0], [1], [0, 0, 1, 1], [], []>} : vector<8x128xf32>, vector<128x128xf32>, vector<8x128xf32> -> vector<8x128xf32>
    %107 = arith.addf %105, %106 : vector<8x128xf32>
    %108 = vector.broadcast %12 : vector<1x128xf32> to vector<8x128xf32>
    %109 = arith.addf %107, %108 : vector<8x128xf32>
    %110 = math.tanh %109 : vector<8x128xf32>
    %c8_i32 = arith.constant 8 : i32
    %c0_59 = arith.constant 0 : index
    %c0_60 = arith.constant 0 : index
    %111 = vector.load %arg7[%c0_59, %c0_60] : memref<128x128xf32, #tpu.memory_space<vmem>>, vector<128x128xf32>
    %cst_61 = arith.constant dense<0.000000e+00> : vector<8x128xf32>
    %112 = tpu.matmul %110, %111, %cst_61 {dimension_numbers = #tpu.dot_dimension_numbers<[1], [0], [0], [1], [0, 0, 1, 1], [], []>} : vector<8x128xf32>, vector<128x128xf32>, vector<8x128xf32> -> vector<8x128xf32>
    %c0_62 = arith.constant 0 : index
    %c0_63 = arith.constant 0 : index
    %113 = vector.load %arg8[%c0_62, %c0_63] : memref<1x128xf32, #tpu.memory_space<vmem>>, vector<1x128xf32>
    %114 = vector.broadcast %113 : vector<1x128xf32> to vector<8x128xf32>
    %115 = arith.addf %112, %114 : vector<8x128xf32>
    %cst_64 = arith.constant dense<0xFF800000> : vector<8xf32>
    %116 = vector.multi_reduction <maximumf>, %115, %cst_64 [1] : vector<8x128xf32> to vector<8xf32>
    %117 = vector.shape_cast %116 : vector<8xf32> to vector<8x1xf32>
    %118 = vector.broadcast %117 : vector<8x1xf32> to vector<8x128xf32>
    %119 = arith.subf %115, %118 : vector<8x128xf32>
    %120 = math.exp %119 : vector<8x128xf32>
    %cst_65 = arith.constant dense<0.000000e+00> : vector<8xf32>
    %121 = vector.multi_reduction <add>, %120, %cst_65 [1] : vector<8x128xf32> to vector<8xf32>
    %122 = vector.shape_cast %121 : vector<8xf32> to vector<8x1xf32>
    %123 = math.log %122 : vector<8x1xf32>
    %124 = vector.broadcast %123 : vector<8x1xf32> to vector<8x128xf32>
    %125 = arith.subf %119, %124 : vector<8x128xf32>
    %c0_66 = arith.constant 0 : index
    %c0_67 = arith.constant 0 : index
    %126 = vector.load %arg9[%c0_66, %c0_67] : memref<8x128xf32, #tpu.memory_space<vmem>>, vector<8x128xf32>
    tpu.vector_store %arg9[%c0_66, %c0_67], %125 {strides = array<i32>} : memref<8x128xf32, #tpu.memory_space<vmem>>, vector<8x128xf32>,
    return
  }
}

</mosaic_0001>

<llo_original>
// kernel: tpu_custom_call.1
$region0: #{tpu_custom_call.1}
  #allocation0 [shape = 'u32[]', space=smem, size = 0x4, offset = 0x4, fixed_abs, tag = 'smem constant byte address 0x4 - core index']
  #allocation1 [shape = 'u32[72,128]{1,0:T(1,128)}', space=vmem, size = 0x9000, scoped, tag = 'internal scratch']
  #allocation2 [shape = 'f32[8,8,128]{2,1,0:T(8,128)}', space=vmem, size = 0x8000, scoped, tag = 'scratch operand']
  %s0 = inlined_call_operand.hbm [shape: f32[8,8,128], index: 0, kind: input, shape index: {}]
  %s1 = inlined_call_operand.hbm [shape: f32[128,128], index: 1, kind: input, shape index: {}]
  %s2 = inlined_call_operand.vmem [shape: f32[1,128], index: 2, kind: input, shape index: {}]
  %s3 = inlined_call_operand.hbm [shape: f32[128,128], index: 3, kind: input, shape index: {}]
  %s4 = inlined_call_operand.hbm [shape: f32[128,128], index: 4, kind: input, shape index: {}]
  %s5 = inlined_call_operand.hbm [shape: f32[128,128], index: 5, kind: input, shape index: {}]
  %s6 = inlined_call_operand.vmem [shape: f32[1,128], index: 6, kind: input, shape index: {}]
  %s7 = inlined_call_operand.hbm [shape: f32[128,128], index: 7, kind: input, shape index: {}]
  %s8 = inlined_call_operand.vmem [shape: f32[1,128], index: 8, kind: input, shape index: {}]
  %s9 = inlined_call_operand.hbm [shape: f32[8,128], index: 9, kind: output, shape index: {}]
  %s10 = sld [smem:[#allocation0]]
  $region70: #{tpu_custom_call.1} parent=0
    _
  %s12 = ssub.s32 1, %s10
  %s13 = scalar_select 0, %s12, %s10
  $region1: #{tpu_custom_call.1} parent=0
    #allocation3 [shape = 'u8[32768]{0}', space=vmem, size = 0x8000, scoped, tag = 'input window, operand 0, single buffered']
    #allocation4 [shape = 's32[1]{0}', space=sflag, size = 0x4, scoped, tag = 'scoped memory for tpu_custom_call.1']
    #allocation5 [shape = 's32[1]{0}', space=sflag, size = 0x4, scoped, tag = 'scoped memory for tpu_custom_call.1']
    #allocation6 [shape = 'u8[65536]{0}', space=vmem, size = 0x10000, scoped, tag = 'input window, operand 1, single buffered']
    #allocation7 [shape = 's32[1]{0}', space=sflag, size = 0x4, scoped, tag = 'scoped memory for tpu_custom_call.1']
    #allocation8 [shape = 'u8[65536]{0}', space=vmem, size = 0x10000, scoped, tag = 'input window, operand 3, single buffered']
    #allocation9 [shape = 'u8[65536]{0}', space=vmem, size = 0x10000, scoped, tag = 'input window, operand 4, single buffered']
    #allocation10 [shape = 's32[1]{0}', space=sflag, size = 0x4, scoped, tag = 'scoped memory for tpu_custom_call.1']
    #allocation11 [shape = 'u8[65536]{0}', space=vmem, size = 0x10000, scoped, tag = 'input window, operand 5, single buffered']
    #allocation12 [shape = 'u8[65536]{0}', space=vmem, size = 0x10000, scoped, tag = 'input window, operand 7, single buffered']
    #allocation13 [shape = 's32[1]{0}', space=sflag, size = 0x4, scoped, tag = 'scoped memory for tpu_custom_call.1']
    #allocation14 [shape = 'u8[4096]{0}', space=vmem, size = 0x1000, scoped, tag = 'output window, operand 0, single buffered']
    %14 = vsyncpa [#allocation4], 0
    %15 = vsyncpa [#allocation7], 0
    %16 = vsyncpa [#allocation10], 0
    %17 = vsyncpa [#allocation13], 0
    %18 = vsyncpa [#allocation5], 0
    // Predicated region
    $region2: #{tpu_custom_call.1} parent=1 // pred_check
      _
    $region3: #{tpu_custom_call.1} parent=1 // pred_check_branch
      %20 = sbr.rel (0) target = $region5
    $region4: #{tpu_custom_call.1} parent=1 // pred_region
      %22 = vsyncadd [#allocation4], 0
      %s23 = sshll.u32 %s0, 4
      %s24 = int_to_ptr.hbm [resolvable:$true] %s23
      %s25 = sshll.u32 [#allocation3], 4
      %s26 = int_to_ptr.vmem [resolvable:$true] %s25
      %31 = dma.hbm_to_vmem [thread:$0]  %s24, 1024, %s26, [#allocation4], 128, 128, 8
    $region5: #{tpu_custom_call.1} parent=1 // pred_fallthru
      _
    // Predicated region
    $region6: #{tpu_custom_call.1} parent=1 // pred_check
      _
    $region7: #{tpu_custom_call.1} parent=1 // pred_check_branch
      %33 = sbr.rel (0) target = $region9
    $region8: #{tpu_custom_call.1} parent=1 // pred_region
      %35 = vsyncadd [#allocation7], 0
      %s36 = sshll.u32 %s1, 4
      %s37 = int_to_ptr.hbm [resolvable:$true] %s36
      %s38 = sshll.u32 [#allocation6], 4
      %s39 = int_to_ptr.vmem [resolvable:$true] %s38
      %44 = dma.hbm_to_vmem [thread:$0]  %s37, 2048, %s39, [#allocation7], 128, 128, 8
    $region9: #{tpu_custom_call.1} parent=1 // pred_fallthru
      _
    // Predicated region
    $region10: #{tpu_custom_call.1} parent=1 // pred_check
      _
    $region11: #{tpu_custom_call.1} parent=1 // pred_check_branch
      %46 = sbr.rel (0) target = $region13
    $region12: #{tpu_custom_call.1} parent=1 // pred_region
      _
    $region13: #{tpu_custom_call.1} parent=1 // pred_fallthru
      _
    // Predicated region
    $region14: #{tpu_custom_call.1} parent=1 // pred_check
      _
    $region15: #{tpu_custom_call.1} parent=1 // pred_check_branch
      %48 = sbr.rel (0) target = $region17
    $region16: #{tpu_custom_call.1} parent=1 // pred_region
      %50 = vsyncadd [#allocation7], 0
      %s51 = sshll.u32 %s3, 4
      %s52 = int_to_ptr.hbm [resolvable:$true] %s51
      %s53 = sshll.u32 [#allocation8], 4
      %s54 = int_to_ptr.vmem [resolvable:$true] %s53
      %59 = dma.hbm_to_vmem [thread:$0]  %s52, 2048, %s54, [#allocation7], 128, 128, 8
    $region17: #{tpu_custom_call.1} parent=1 // pred_fallthru
      _
    // Predicated region
    $region18: #{tpu_custom_call.1} parent=1 // pred_check
      _
    $region19: #{tpu_custom_call.1} parent=1 // pred_check_branch
      %61 = sbr.rel (0) target = $region21
    $region20: #{tpu_custom_call.1} parent=1 // pred_region
      %63 = vsyncadd [#allocation10], 0
      %s64 = sshll.u32 %s4, 4
      %s65 = int_to_ptr.hbm [resolvable:$true] %s64
      %s66 = sshll.u32 [#allocation9], 4
      %s67 = int_to_ptr.vmem [resolvable:$true] %s66
      %72 = dma.hbm_to_vmem [thread:$0]  %s65, 2048, %s67, [#allocation10], 128, 128, 8
    $region21: #{tpu_custom_call.1} parent=1 // pred_fallthru
      _
    // Predicated region
    $region22: #{tpu_custom_call.1} parent=1 // pred_check
      _
    $region23: #{tpu_custom_call.1} parent=1 // pred_check_branch
      %74 = sbr.rel (0) target = $region25
    $region24: #{tpu_custom_call.1} parent=1 // pred_region
      %76 = vsyncadd [#allocation10], 0
      %s77 = sshll.u32 %s5, 4
      %s78 = int_to_ptr.hbm [resolvable:$true] %s77
      %s79 = sshll.u32 [#allocation11], 4
      %s80 = int_to_ptr.vmem [resolvable:$true] %s79
      %85 = dma.hbm_to_vmem [thread:$0]  %s78, 2048, %s80, [#allocation10], 128, 128, 8
    $region25: #{tpu_custom_call.1} parent=1 // pred_fallthru
      _
    // Predicated region
    $region26: #{tpu_custom_call.1} parent=1 // pred_check
      _
    $region27: #{tpu_custom_call.1} parent=1 // pred_check_branch
      %87 = sbr.rel (0) target = $region29
    $region28: #{tpu_custom_call.1} parent=1 // pred_region
      _
    $region29: #{tpu_custom_call.1} parent=1 // pred_fallthru
      _
    // Predicated region
    $region30: #{tpu_custom_call.1} parent=1 // pred_check
      _
    $region31: #{tpu_custom_call.1} parent=1 // pred_check_branch
      %89 = sbr.rel (0) target = $region33
    $region32: #{tpu_custom_call.1} parent=1 // pred_region
      %91 = vsyncadd [#allocation13], 0
      %s92 = sshll.u32 %s7, 4
      %s93 = int_to_ptr.hbm [resolvable:$true] %s92
      %s94 = sshll.u32 [#allocation12], 4
      %s95 = int_to_ptr.vmem [resolvable:$true] %s94
      %100 = dma.hbm_to_vmem [thread:$0]  %s93, 2048, %s95, [#allocation13], 128, 128, 8
    $region33: #{tpu_custom_call.1} parent=1 // pred_fallthru
      _
    // Predicated region
    $region34: #{tpu_custom_call.1} parent=1 // pred_check
      _
    $region35: #{tpu_custom_call.1} parent=1 // pred_check_branch
      %102 = sbr.rel (0) target = $region37
    $region36: #{tpu_custom_call.1} parent=1 // pred_region
      _
    $region37: #{tpu_custom_call.1} parent=1 // pred_fallthru
      _
    // Predicated region
    $region38: #{tpu_custom_call.1} parent=1 // pred_check
      _
    $region39: #{tpu_custom_call.1} parent=1 // pred_check_branch
      %104 = sbr.rel (0) target = $region41
    $region40: #{tpu_custom_call.1} parent=1 // pred_region
      %106 = dma.done [#allocation4], 1024
    $region41: #{tpu_custom_call.1} parent=1 // pred_fallthru
      _
    // Predicated region
    $region42: #{tpu_custom_call.1} parent=1 // pred_check
      _
    $region43: #{tpu_custom_call.1} parent=1 // pred_check_branch
      %108 = sbr.rel (0) target = $region45
    $region44: #{tpu_custom_call.1} parent=1 // pred_region
      %110 = dma.done [#allocation7], 2048
    $region45: #{tpu_custom_call.1} parent=1 // pred_fallthru
      _
    // Predicated region
    $region46: #{tpu_custom_call.1} parent=1 // pred_check
      _
    $region47: #{tpu_custom_call.1} parent=1 // pred_check_branch
      %112 = sbr.rel (0) target = $region49
    $region48: #{tpu_custom_call.1} parent=1 // pred_region
      %114 = dma.done [#allocation7], 2048
    $region49: #{tpu_custom_call.1} parent=1 // pred_fallthru
      _
    // Predicated region
    $region50: #{tpu_custom_call.1} parent=1 // pred_check
      _
    $region51: #{tpu_custom_call.1} parent=1 // pred_check_branch
      %116 = sbr.rel (0) target = $region53
    $region52: #{tpu_custom_call.1} parent=1 // pred_region
      %118 = dma.done [#allocation10], 2048
    $region53: #{tpu_custom_call.1} parent=1 // pred_fallthru
      _
    // Predicated region
    $region54: #{tpu_custom_call.1} parent=1 // pred_check
      _
    $region55: #{tpu_custom_call.1} parent=1 // pred_check_branch
      %120 = sbr.rel (0) target = $region57
    $region56: #{tpu_custom_call.1} parent=1 // pred_region
      %122 = dma.done [#allocation10], 2048
    $region57: #{tpu_custom_call.1} parent=1 // pred_fallthru
      _
    // Predicated region
    $region58: #{tpu_custom_call.1} parent=1 // pred_check
      _
    $region59: #{tpu_custom_call.1} parent=1 // pred_check_branch
      %124 = sbr.rel (0) target = $region61
    $region60: #{tpu_custom_call.1} parent=1 // pred_region
      %126 = dma.done [#allocation13], 2048
    $region61: #{tpu_custom_call.1} parent=1 // pred_fallthru
      _
    %v127 = vld [vmem:[#allocation3] sm:$0xff]
    %v128 = vld [vmem:[#allocation3 + $0x8] sm:$0xff]
    %v129 = vld [vmem:[#allocation3 + $0x10] sm:$0xff]
    %v130 = vld [vmem:[#allocation3 + $0x18] sm:$0xff]
    %v131 = vld [vmem:[#allocation3 + $0x20] sm:$0xff]
    %v132 = vld [vmem:[#allocation3 + $0x28] sm:$0xff]
    %v133 = vld [vmem:[#allocation3 + $0x30] sm:$0xff]
    %v134 = vld [vmem:[#allocation3 + $0x38] sm:$0xff]
    %v135 = vld [vmem:[#allocation6] sm:$0xff]
    %v136 = vld [vmem:[#allocation6 + $0x8] sm:$0xff]
    %v137 = vld [vmem:[#allocation6 + $0x10] sm:$0xff]
    %v138 = vld [vmem:[#allocation6 + $0x18] sm:$0xff]
    %v139 = vld [vmem:[#allocation6 + $0x20] sm:$0xff]
    %v140 = vld [vmem:[#allocation6 + $0x28] sm:$0xff]
    %v141 = vld [vmem:[#allocation6 + $0x30] sm:$0xff]
    %v142 = vld [vmem:[#allocation6 + $0x38] sm:$0xff]
    %v143 = vld [vmem:[#allocation6 + $0x40] sm:$0xff]
    %v144 = vld [vmem:[#allocation6 + $0x48] sm:$0xff]
    %v145 = vld [vmem:[#allocation6 + $0x50] sm:$0xff]
    %v146 = vld [vmem:[#allocation6 + $0x58] sm:$0xff]
    %v147 = vld [vmem:[#allocation6 + $0x60] sm:$0xff]
    %v148 = vld [vmem:[#allocation6 + $0x68] sm:$0xff]
    %v149 = vld [vmem:[#allocation6 + $0x70] sm:$0xff]
    %v150 = vld [vmem:[#allocation6 + $0x78] sm:$0xff]
    %v151 = vld [vmem:[%s2] sm:$0x1]
    %v153 = vperm.slane %v151, 0
    %155 = vmatpush.msra.mxu0 %v150
    %156 = vmatpush.msra.mxu0 %v149
    %157 = vmatpush.msra.mxu0 %v148
    %158 = vmatpush.msra.mxu0 %v147
    %159 = vmatpush.msra.mxu0 %v146
    %160 = vmatpush.msra.mxu0 %v145
    %161 = vmatpush.msra.mxu0 %v144
    %162 = vmatpush.msra.mxu0 %v143
    %163 = vmatpush.msra.mxu0 %v142
    %164 = vmatpush.msra.mxu0 %v141
    %165 = vmatpush.msra.mxu0 %v140
    %166 = vmatpush.msra.mxu0 %v139
    %167 = vmatpush.msra.mxu0 %v138
    %168 = vmatpush.msra.mxu0 %v137
    %169 = vmatpush.msra.mxu0 %v136
    %170 = vmatpush.msra.mxu0 %v135
    %171 = vmatmul.f32.gmra.mxu0 %v127
    %v172 = vpop.f32.mrf.mxu0
    %v173 = vadd.f32 %v153, %v172
    %174 = vmatmul.f32.gmra.mxu0 %v128
    %v175 = vpop.f32.mrf.mxu0
    %v176 = vadd.f32 %v153, %v175
    %177 = vmatmul.f32.gmra.mxu0 %v129
    %v178 = vpop.f32.mrf.mxu0
    %v179 = vadd.f32 %v153, %v178
    %180 = vmatmul.f32.gmra.mxu0 %v130
    %v181 = vpop.f32.mrf.mxu0
    %v182 = vadd.f32 %v153, %v181
    %183 = vmatmul.f32.gmra.mxu0 %v131
    %v184 = vpop.f32.mrf.mxu0
    %v185 = vadd.f32 %v153, %v184
    %186 = vmatmul.f32.gmra.mxu0 %v132
    %v187 = vpop.f32.mrf.mxu0
    %v188 = vadd.f32 %v153, %v187
    %189 = vmatmul.f32.gmra.mxu0 %v133
    %v190 = vpop.f32.mrf.mxu0
    %v191 = vadd.f32 %v153, %v190
    %192 = vmatmul.f32.gmra.mxu0 %v134
    %v193 = vpop.f32.mrf.mxu0
    %v194 = vadd.f32 %v153, %v193
    %195 = vdwg.mxu0
    %196 = vst [vmem:[#allocation2] sm:$0xff] %v173
    %197 = vst [vmem:[#allocation2 + $0x8] sm:$0xff] %v176
    %198 = vst [vmem:[#allocation2 + $0x10] sm:$0xff] %v179
    %199 = vst [vmem:[#allocation2 + $0x18] sm:$0xff] %v182
    %200 = vst [vmem:[#allocation2 + $0x20] sm:$0xff] %v185
    %201 = vst [vmem:[#allocation2 + $0x28] sm:$0xff] %v188
    %202 = vst [vmem:[#allocation2 + $0x30] sm:$0xff] %v191
    %203 = vst [vmem:[#allocation2 + $0x38] sm:$0xff] %v194
    %v204 = vld [vmem:[#allocation8] sm:$0xff]
    %v205 = vld [vmem:[#allocation8 + $0x8] sm:$0xff]
    %v206 = vld [vmem:[#allocation8 + $0x10] sm:$0xff]
    %v207 = vld [vmem:[#allocation8 + $0x18] sm:$0xff]
    %v208 = vld [vmem:[#allocation8 + $0x20] sm:$0xff]
    %v209 = vld [vmem:[#allocation8 + $0x28] sm:$0xff]
    %v210 = vld [vmem:[#allocation8 + $0x30] sm:$0xff]
    %v211 = vld [vmem:[#allocation8 + $0x38] sm:$0xff]
    %v212 = vld [vmem:[#allocation8 + $0x40] sm:$0xff]
    %v213 = vld [vmem:[#allocation8 + $0x48] sm:$0xff]
    %v214 = vld [vmem:[#allocation8 + $0x50] sm:$0xff]
    %v215 = vld [vmem:[#allocation8 + $0x58] sm:$0xff]
    %v216 = vld [vmem:[#allocation8 + $0x60] sm:$0xff]
    %v217 = vld [vmem:[#allocation8 + $0x68] sm:$0xff]
    %v218 = vld [vmem:[#allocation8 + $0x70] sm:$0xff]
    %v219 = vld [vmem:[#allocation8 + $0x78] sm:$0xff]
    %v220 = vld [vmem:[#allocation9] sm:$0xff]
    %v221 = vld [vmem:[#allocation9 + $0x8] sm:$0xff]
    %v222 = vld [vmem:[#allocation9 + $0x10] sm:$0xff]
    %v223 = vld [vmem:[#allocation9 + $0x18] sm:$0xff]
    %v224 = vld [vmem:[#allocation9 + $0x20] sm:$0xff]
    %v225 = vld [vmem:[#allocation9 + $0x28] sm:$0xff]
    %v226 = vld [vmem:[#allocation9 + $0x30] sm:$0xff]
    %v227 = vld [vmem:[#allocation9 + $0x38] sm:$0xff]
    %v228 = vld [vmem:[#allocation9 + $0x40] sm:$0xff]
    %v229 = vld [vmem:[#allocation9 + $0x48] sm:$0xff]
    %v230 = vld [vmem:[#allocation9 + $0x50] sm:$0xff]
    %v231 = vld [vmem:[#allocation9 + $0x58] sm:$0xff]
    %v232 = vld [vmem:[#allocation9 + $0x60] sm:$0xff]
    %v233 = vld [vmem:[#allocation9 + $0x68] sm:$0xff]
    %v234 = vld [vmem:[#allocation9 + $0x70] sm:$0xff]
    %v235 = vld [vmem:[#allocation9 + $0x78] sm:$0xff]
    %v236 = vld [vmem:[#allocation11] sm:$0xff]
    %v237 = vld [vmem:[#allocation11 + $0x8] sm:$0xff]
    %v238 = vld [vmem:[#allocation11 + $0x10] sm:$0xff]
    %v239 = vld [vmem:[#allocation11 + $0x18] sm:$0xff]
    %v240 = vld [vmem:[#allocation11 + $0x20] sm:$0xff]
    %v241 = vld [vmem:[#allocation11 + $0x28] sm:$0xff]
    %v242 = vld [vmem:[#allocation11 + $0x30] sm:$0xff]
    %v243 = vld [vmem:[#allocation11 + $0x38] sm:$0xff]
    %v244 = vld [vmem:[#allocation11 + $0x40] sm:$0xff]
    %v245 = vld [vmem:[#allocation11 + $0x48] sm:$0xff]
    %v246 = vld [vmem:[#allocation11 + $0x50] sm:$0xff]
    %v247 = vld [vmem:[#allocation11 + $0x58] sm:$0xff]
    %v248 = vld [vmem:[#allocation11 + $0x60] sm:$0xff]
    %v249 = vld [vmem:[#allocation11 + $0x68] sm:$0xff]
    %v250 = vld [vmem:[#allocation11 + $0x70] sm:$0xff]
    %v251 = vld [vmem:[#allocation11 + $0x78] sm:$0xff]
    %v252 = vld [vmem:[%s6] sm:$0x1]
    %v253 = vld [vmem:[#allocation2] sm:$0xff]
    %254 = vmatpush.msra.mxu0 %v219
    %255 = vmatpush.msra.mxu0 %v218
    %256 = vmatpush.msra.mxu0 %v217
    %257 = vmatpush.msra.mxu0 %v216
    %258 = vmatpush.msra.mxu0 %v215
    %259 = vmatpush.msra.mxu0 %v214
    %260 = vmatpush.msra.mxu0 %v213
    %261 = vmatpush.msra.mxu0 %v212
    %262 = vmatpush.msra.mxu0 %v211
    %263 = vmatpush.msra.mxu0 %v210
    %264 = vmatpush.msra.mxu0 %v209
    %265 = vmatpush.msra.mxu0 %v208
    %266 = vmatpush.msra.mxu0 %v207
    %267 = vmatpush.msra.mxu0 %v206
    %268 = vmatpush.msra.mxu0 %v205
    %269 = vmatpush.msra.mxu0 %v204
    %270 = vmatmul.f32.gmra.mxu0 0.0
    %v271 = vpop.f32.mrf.mxu0
    %v272 = vadd.f32 0.0, %v271
    %273 = vdwg.mxu0
    %v274 = vadd.f32 %v253, %v272
    %v275 = vtanh.pop %v274
    %276 = vmatpush.msra.mxu0 %v251
    %277 = vmatpush.msra.mxu0 %v250
    %278 = vmatpush.msra.mxu0 %v249
    %279 = vmatpush.msra.mxu0 %v248
    %280 = vmatpush.msra.mxu0 %v247
    %281 = vmatpush.msra.mxu0 %v246
    %282 = vmatpush.msra.mxu0 %v245
    %283 = vmatpush.msra.mxu0 %v244
    %284 = vmatpush.msra.mxu0 %v243
    %285 = vmatpush.msra.mxu0 %v242
    %286 = vmatpush.msra.mxu0 %v241
    %287 = vmatpush.msra.mxu0 %v240
    %288 = vmatpush.msra.mxu0 %v239
    %289 = vmatpush.msra.mxu0 %v238
    %290 = vmatpush.msra.mxu0 %v237
    %291 = vmatpush.msra.mxu0 %v236
    %292 = vmatmul.f32.gmra.mxu0 0.0
    %v293 = vpop.f32.mrf.mxu0
    %v294 = vadd.f32 0.0, %v293
    %295 = vdwg.mxu0
    %296 = vmatpush.msra.mxu0 %v235
    %297 = vmatpush.msra.mxu0 %v234
    %298 = vmatpush.msra.mxu0 %v233
    %299 = vmatpush.msra.mxu0 %v232
    %300 = vmatpush.msra.mxu0 %v231
    %301 = vmatpush.msra.mxu0 %v230
    %302 = vmatpush.msra.mxu0 %v229
    %303 = vmatpush.msra.mxu0 %v228
    %304 = vmatpush.msra.mxu0 %v227
    %305 = vmatpush.msra.mxu0 %v226
    %306 = vmatpush.msra.mxu0 %v225
    %307 = vmatpush.msra.mxu0 %v224
    %308 = vmatpush.msra.mxu0 %v223
    %309 = vmatpush.msra.mxu0 %v222
    %310 = vmatpush.msra.mxu0 %v221
    %311 = vmatpush.msra.mxu0 %v220
    %312 = vmatmul.f32.gmra.mxu0 %v275
    %v313 = vpop.f32.mrf.mxu0
    %v314 = vadd.f32 %v294, %v313
    %315 = vdwg.mxu0
    %v317 = vperm.slane %v252, 0
    %v319 = vadd.f32 %v314, %v317
    %v320 = vtanh.pop %v319
    %s321 = scalar_lea.vmem [#allocation2], 8
    %v322 = vld [vmem:[%s321] sm:$0xff]
    %323 = vmatpush.msra.mxu0 %v219
    %324 = vmatpush.msra.mxu0 %v218
    %325 = vmatpush.msra.mxu0 %v217
    %326 = vmatpush.msra.mxu0 %v216
    %327 = vmatpush.msra.mxu0 %v215
    %328 = vmatpush.msra.mxu0 %v214
    %329 = vmatpush.msra.mxu0 %v213
    %330 = vmatpush.msra.mxu0 %v212
    %331 = vmatpush.msra.mxu0 %v211
    %332 = vmatpush.msra.mxu0 %v210
    %333 = vmatpush.msra.mxu0 %v209
    %334 = vmatpush.msra.mxu0 %v208
    %335 = vmatpush.msra.mxu0 %v207
    %336 = vmatpush.msra.mxu0 %v206
    %337 = vmatpush.msra.mxu0 %v205
    %338 = vmatpush.msra.mxu0 %v204
    %339 = vmatmul.f32.gmra.mxu0 %v275
    %v340 = vpop.f32.mrf.mxu0
    %v341 = vadd.f32 0.0, %v340
    %342 = vdwg.mxu0
    %v343 = vadd.f32 %v322, %v341
    %v344 = vtanh.pop %v343
    %345 = vmatpush.msra.mxu0 %v251
    %346 = vmatpush.msra.mxu0 %v250
    %347 = vmatpush.msra.mxu0 %v249
    %348 = vmatpush.msra.mxu0 %v248
    %349 = vmatpush.msra.mxu0 %v247
    %350 = vmatpush.msra.mxu0 %v246
    %351 = vmatpush.msra.mxu0 %v245
    %352 = vmatpush.msra.mxu0 %v244
    %353 = vmatpush.msra.mxu0 %v243
    %354 = vmatpush.msra.mxu0 %v242
    %355 = vmatpush.msra.mxu0 %v241
    %356 = vmatpush.msra.mxu0 %v240
    %357 = vmatpush.msra.mxu0 %v239
    %358 = vmatpush.msra.mxu0 %v238
    %359 = vmatpush.msra.mxu0 %v237
    %360 = vmatpush.msra.mxu0 %v236
    %361 = vmatmul.f32.gmra.mxu0 %v320
    %v362 = vpop.f32.mrf.mxu0
    %v363 = vadd.f32 0.0, %v362
    %364 = vdwg.mxu0
    %365 = vmatpush.msra.mxu0 %v235
    %366 = vmatpush.msra.mxu0 %v234
    %367 = vmatpush.msra.mxu0 %v233
    %368 = vmatpush.msra.mxu0 %v232
    %369 = vmatpush.msra.mxu0 %v231
    %370 = vmatpush.msra.mxu0 %v230
    %371 = vmatpush.msra.mxu0 %v229
    %372 = vmatpush.msra.mxu0 %v228
    %373 = vmatpush.msra.mxu0 %v227
    %374 = vmatpush.msra.mxu0 %v226
    %375 = vmatpush.msra.mxu0 %v225
    %376 = vmatpush.msra.mxu0 %v224
    %377 = vmatpush.msra.mxu0 %v223
    %378 = vmatpush.msra.mxu0 %v222
    %379 = vmatpush.msra.mxu0 %v221
    %380 = vmatpush.msra.mxu0 %v220
    %381 = vmatmul.f32.gmra.mxu0 %v344
    %v382 = vpop.f32.mrf.mxu0
    %v383 = vadd.f32 %v363, %v382
    %384 = vdwg.mxu0
    %v385 = vadd.f32 %v383, %v317
    %v386 = vtanh.pop %v385
    %s387 = scalar_lea.vmem [#allocation2], 16
    %v388 = vld [vmem:[%s387] sm:$0xff]
    %389 = vmatpush.msra.mxu0 %v219
    %390 = vmatpush.msra.mxu0 %v218
    %391 = vmatpush.msra.mxu0 %v217
    %392 = vmatpush.msra.mxu0 %v216
    %393 = vmatpush.msra.mxu0 %v215
    %394 = vmatpush.msra.mxu0 %v214
    %395 = vmatpush.msra.mxu0 %v213
    %396 = vmatpush.msra.mxu0 %v212
    %397 = vmatpush.msra.mxu0 %v211
    %398 = vmatpush.msra.mxu0 %v210
    %399 = vmatpush.msra.mxu0 %v209
    %400 = vmatpush.msra.mxu0 %v208
    %401 = vmatpush.msra.mxu0 %v207
    %402 = vmatpush.msra.mxu0 %v206
    %403 = vmatpush.msra.mxu0 %v205
    %404 = vmatpush.msra.mxu0 %v204
    %405 = vmatmul.f32.gmra.mxu0 %v344
    %v406 = vpop.f32.mrf.mxu0
    %v407 = vadd.f32 0.0, %v406
    %408 = vdwg.mxu0
    %v409 = vadd.f32 %v388, %v407
    %v410 = vtanh.pop %v409
    %411 = vmatpush.msra.mxu0 %v251
    %412 = vmatpush.msra.mxu0 %v250
    %413 = vmatpush.msra.mxu0 %v249
    %414 = vmatpush.msra.mxu0 %v248
    %415 = vmatpush.msra.mxu0 %v247
    %416 = vmatpush.msra.mxu0 %v246
    %417 = vmatpush.msra.mxu0 %v245
    %418 = vmatpush.msra.mxu0 %v244
    %419 = vmatpush.msra.mxu0 %v243
    %420 = vmatpush.msra.mxu0 %v242
    %421 = vmatpush.msra.mxu0 %v241
    %422 = vmatpush.msra.mxu0 %v240
    %423 = vmatpush.msra.mxu0 %v239
    %424 = vmatpush.msra.mxu0 %v238
    %425 = vmatpush.msra.mxu0 %v237
    %426 = vmatpush.msra.mxu0 %v236
    %427 = vmatmul.f32.gmra.mxu0 %v386
    %v428 = vpop.f32.mrf.mxu0
    %v429 = vadd.f32 0.0, %v428
    %430 = vdwg.mxu0
    %431 = vmatpush.msra.mxu0 %v235
    %432 = vmatpush.msra.mxu0 %v234
    %433 = vmatpush.msra.mxu0 %v233
    %434 = vmatpush.msra.mxu0 %v232
    %435 = vmatpush.msra.mxu0 %v231
    %436 = vmatpush.msra.mxu0 %v230
    %437 = vmatpush.msra.mxu0 %v229
    %438 = vmatpush.msra.mxu0 %v228
    %439 = vmatpush.msra.mxu0 %v227
    %440 = vmatpush.msra.mxu0 %v226
    %441 = vmatpush.msra.mxu0 %v225
    %442 = vmatpush.msra.mxu0 %v224
    %443 = vmatpush.msra.mxu0 %v223
    %444 = vmatpush.msra.mxu0 %v222
    %445 = vmatpush.msra.mxu0 %v221
    %446 = vmatpush.msra.mxu0 %v220
    %447 = vmatmul.f32.gmra.mxu0 %v410
    %v448 = vpop.f32.mrf.mxu0
    %v449 = vadd.f32 %v429, %v448
    %450 = vdwg.mxu0
    %v451 = vadd.f32 %v449, %v317
    %v452 = vtanh.pop %v451
    %s453 = scalar_lea.vmem [#allocation2], 24
    %v454 = vld [vmem:[%s453] sm:$0xff]
    %455 = vmatpush.msra.mxu0 %v219
    %456 = vmatpush.msra.mxu0 %v218
    %457 = vmatpush.msra.mxu0 %v217
    %458 = vmatpush.msra.mxu0 %v216
    %459 = vmatpush.msra.mxu0 %v215
    %460 = vmatpush.msra.mxu0 %v214
    %461 = vmatpush.msra.mxu0 %v213
    %462 = vmatpush.msra.mxu0 %v212
    %463 = vmatpush.msra.mxu0 %v211
    %464 = vmatpush.msra.mxu0 %v210
    %465 = vmatpush.msra.mxu0 %v209
    %466 = vmatpush.msra.mxu0 %v208
    %467 = vmatpush.msra.mxu0 %v207
    %468 = vmatpush.msra.mxu0 %v206
    %469 = vmatpush.msra.mxu0 %v205
    %470 = vmatpush.msra.mxu0 %v204
    %471 = vmatmul.f32.gmra.mxu0 %v410
    %v472 = vpop.f32.mrf.mxu0
    %v473 = vadd.f32 0.0, %v472
    %474 = vdwg.mxu0
    %v475 = vadd.f32 %v454, %v473
    %v476 = vtanh.pop %v475
    %477 = vmatpush.msra.mxu0 %v251
    %478 = vmatpush.msra.mxu0 %v250
    %479 = vmatpush.msra.mxu0 %v249
    %480 = vmatpush.msra.mxu0 %v248
    %481 = vmatpush.msra.mxu0 %v247
    %482 = vmatpush.msra.mxu0 %v246
    %483 = vmatpush.msra.mxu0 %v245
    %484 = vmatpush.msra.mxu0 %v244
    %485 = vmatpush.msra.mxu0 %v243
    %486 = vmatpush.msra.mxu0 %v242
    %487 = vmatpush.msra.mxu0 %v241
    %488 = vmatpush.msra.mxu0 %v240
    %489 = vmatpush.msra.mxu0 %v239
    %490 = vmatpush.msra.mxu0 %v238
    %491 = vmatpush.msra.mxu0 %v237
    %492 = vmatpush.msra.mxu0 %v236
    %493 = vmatmul.f32.gmra.mxu0 %v452
    %v494 = vpop.f32.mrf.mxu0
    %v495 = vadd.f32 0.0, %v494
    %496 = vdwg.mxu0
    %497 = vmatpush.msra.mxu0 %v235
    %498 = vmatpush.msra.mxu0 %v234
    %499 = vmatpush.msra.mxu0 %v233
    %500 = vmatpush.msra.mxu0 %v232
    %501 = vmatpush.msra.mxu0 %v231
    %502 = vmatpush.msra.mxu0 %v230
    %503 = vmatpush.msra.mxu0 %v229
    %504 = vmatpush.msra.mxu0 %v228
    %505 = vmatpush.msra.mxu0 %v227
    %506 = vmatpush.msra.mxu0 %v226
    %507 = vmatpush.msra.mxu0 %v225
    %508 = vmatpush.msra.mxu0 %v224
    %509 = vmatpush.msra.mxu0 %v223
    %510 = vmatpush.msra.mxu0 %v222
    %511 = vmatpush.msra.mxu0 %v221
    %512 = vmatpush.msra.mxu0 %v220
    %513 = vmatmul.f32.gmra.mxu0 %v476
    %v514 = vpop.f32.mrf.mxu0
    %v515 = vadd.f32 %v495, %v514
    %516 = vdwg.mxu0
    %v517 = vadd.f32 %v515, %v317
    %v518 = vtanh.pop %v517
    %s519 = scalar_lea.vmem [#allocation2], 32
    %v520 = vld [vmem:[%s519] sm:$0xff]
    %521 = vmatpush.msra.mxu0 %v219
    %522 = vmatpush.msra.mxu0 %v218
    %523 = vmatpush.msra.mxu0 %v217
    %524 = vmatpush.msra.mxu0 %v216
    %525 = vmatpush.msra.mxu0 %v215
    %526 = vmatpush.msra.mxu0 %v214
    %527 = vmatpush.msra.mxu0 %v213
    %528 = vmatpush.msra.mxu0 %v212
    %529 = vmatpush.msra.mxu0 %v211
    %530 = vmatpush.msra.mxu0 %v210
    %531 = vmatpush.msra.mxu0 %v209
    %532 = vmatpush.msra.mxu0 %v208
    %533 = vmatpush.msra.mxu0 %v207
    %534 = vmatpush.msra.mxu0 %v206
    %535 = vmatpush.msra.mxu0 %v205
    %536 = vmatpush.msra.mxu0 %v204
    %537 = vmatmul.f32.gmra.mxu0 %v476
    %v538 = vpop.f32.mrf.mxu0
    %v539 = vadd.f32 0.0, %v538
    %540 = vdwg.mxu0
    %v541 = vadd.f32 %v520, %v539
    %v542 = vtanh.pop %v541
    %543 = vmatpush.msra.mxu0 %v251
    %544 = vmatpush.msra.mxu0 %v250
    %545 = vmatpush.msra.mxu0 %v249
    %546 = vmatpush.msra.mxu0 %v248
    %547 = vmatpush.msra.mxu0 %v247
    %548 = vmatpush.msra.mxu0 %v246
    %549 = vmatpush.msra.mxu0 %v245
    %550 = vmatpush.msra.mxu0 %v244
    %551 = vmatpush.msra.mxu0 %v243
    %552 = vmatpush.msra.mxu0 %v242
    %553 = vmatpush.msra.mxu0 %v241
    %554 = vmatpush.msra.mxu0 %v240
    %555 = vmatpush.msra.mxu0 %v239
    %556 = vmatpush.msra.mxu0 %v238
    %557 = vmatpush.msra.mxu0 %v237
    %558 = vmatpush.msra.mxu0 %v236
    %559 = vmatmul.f32.gmra.mxu0 %v518
    %v560 = vpop.f32.mrf.mxu0
    %v561 = vadd.f32 0.0, %v560
    %562 = vdwg.mxu0
    %563 = vmatpush.msra.mxu0 %v235
    %564 = vmatpush.msra.mxu0 %v234
    %565 = vmatpush.msra.mxu0 %v233
    %566 = vmatpush.msra.mxu0 %v232
    %567 = vmatpush.msra.mxu0 %v231
    %568 = vmatpush.msra.mxu0 %v230
    %569 = vmatpush.msra.mxu0 %v229
    %570 = vmatpush.msra.mxu0 %v228
    %571 = vmatpush.msra.mxu0 %v227
    %572 = vmatpush.msra.mxu0 %v226
    %573 = vmatpush.msra.mxu0 %v225
    %574 = vmatpush.msra.mxu0 %v224
    %575 = vmatpush.msra.mxu0 %v223
    %576 = vmatpush.msra.mxu0 %v222
    %577 = vmatpush.msra.mxu0 %v221
    %578 = vmatpush.msra.mxu0 %v220
    %579 = vmatmul.f32.gmra.mxu0 %v542
    %v580 = vpop.f32.mrf.mxu0
    %v581 = vadd.f32 %v561, %v580
    %582 = vdwg.mxu0
    %v583 = vadd.f32 %v581, %v317
    %v584 = vtanh.pop %v583
    %s585 = scalar_lea.vmem [#allocation2], 40
    %v586 = vld [vmem:[%s585] sm:$0xff]
    %587 = vmatpush.msra.mxu0 %v219
    %588 = vmatpush.msra.mxu0 %v218
    %589 = vmatpush.msra.mxu0 %v217
    %590 = vmatpush.msra.mxu0 %v216
    %591 = vmatpush.msra.mxu0 %v215
    %592 = vmatpush.msra.mxu0 %v214
    %593 = vmatpush.msra.mxu0 %v213
    %594 = vmatpush.msra.mxu0 %v212
    %595 = vmatpush.msra.mxu0 %v211
    %596 = vmatpush.msra.mxu0 %v210
    %597 = vmatpush.msra.mxu0 %v209
    %598 = vmatpush.msra.mxu0 %v208
    %599 = vmatpush.msra.mxu0 %v207
    %600 = vmatpush.msra.mxu0 %v206
    %601 = vmatpush.msra.mxu0 %v205
    %602 = vmatpush.msra.mxu0 %v204
    %603 = vmatmul.f32.gmra.mxu0 %v542
    %v604 = vpop.f32.mrf.mxu0
    %v605 = vadd.f32 0.0, %v604
    %606 = vdwg.mxu0
    %v607 = vadd.f32 %v586, %v605
    %v608 = vtanh.pop %v607
    %609 = vmatpush.msra.mxu0 %v251
    %610 = vmatpush.msra.mxu0 %v250
    %611 = vmatpush.msra.mxu0 %v249
    %612 = vmatpush.msra.mxu0 %v248
    %613 = vmatpush.msra.mxu0 %v247
    %614 = vmatpush.msra.mxu0 %v246
    %615 = vmatpush.msra.mxu0 %v245
    %616 = vmatpush.msra.mxu0 %v244
    %617 = vmatpush.msra.mxu0 %v243
    %618 = vmatpush.msra.mxu0 %v242
    %619 = vmatpush.msra.mxu0 %v241
    %620 = vmatpush.msra.mxu0 %v240
    %621 = vmatpush.msra.mxu0 %v239
    %622 = vmatpush.msra.mxu0 %v238
    %623 = vmatpush.msra.mxu0 %v237
    %624 = vmatpush.msra.mxu0 %v236
    %625 = vmatmul.f32.gmra.mxu0 %v584
    %v626 = vpop.f32.mrf.mxu0
    %v627 = vadd.f32 0.0, %v626
    %628 = vdwg.mxu0
    %629 = vmatpush.msra.mxu0 %v235
    %630 = vmatpush.msra.mxu0 %v234
    %631 = vmatpush.msra.mxu0 %v233
    %632 = vmatpush.msra.mxu0 %v232
    %633 = vmatpush.msra.mxu0 %v231
    %634 = vmatpush.msra.mxu0 %v230
    %635 = vmatpush.msra.mxu0 %v229
    %636 = vmatpush.msra.mxu0 %v228
    %637 = vmatpush.msra.mxu0 %v227
    %638 = vmatpush.msra.mxu0 %v226
    %639 = vmatpush.msra.mxu0 %v225
    %640 = vmatpush.msra.mxu0 %v224
    %641 = vmatpush.msra.mxu0 %v223
    %642 = vmatpush.msra.mxu0 %v222
    %643 = vmatpush.msra.mxu0 %v221
    %644 = vmatpush.msra.mxu0 %v220
    %645 = vmatmul.f32.gmra.mxu0 %v608
    %v646 = vpop.f32.mrf.mxu0
    %v647 = vadd.f32 %v627, %v646
    %648 = vdwg.mxu0
    %v649 = vadd.f32 %v647, %v317
    %v650 = vtanh.pop %v649
    %s651 = scalar_lea.vmem [#allocation2], 48
    %v652 = vld [vmem:[%s651] sm:$0xff]
    %653 = vmatpush.msra.mxu0 %v219
    %654 = vmatpush.msra.mxu0 %v218
    %655 = vmatpush.msra.mxu0 %v217
    %656 = vmatpush.msra.mxu0 %v216
    %657 = vmatpush.msra.mxu0 %v215
    %658 = vmatpush.msra.mxu0 %v214
    %659 = vmatpush.msra.mxu0 %v213
    %660 = vmatpush.msra.mxu0 %v212
    %661 = vmatpush.msra.mxu0 %v211
    %662 = vmatpush.msra.mxu0 %v210
    %663 = vmatpush.msra.mxu0 %v209
    %664 = vmatpush.msra.mxu0 %v208
    %665 = vmatpush.msra.mxu0 %v207
    %666 = vmatpush.msra.mxu0 %v206
    %667 = vmatpush.msra.mxu0 %v205
    %668 = vmatpush.msra.mxu0 %v204
    %669 = vmatmul.f32.gmra.mxu0 %v608
    %v670 = vpop.f32.mrf.mxu0
    %v671 = vadd.f32 0.0, %v670
    %672 = vdwg.mxu0
    %v673 = vadd.f32 %v652, %v671
    %v674 = vtanh.pop %v673
    %675 = vmatpush.msra.mxu0 %v251
    %676 = vmatpush.msra.mxu0 %v250
    %677 = vmatpush.msra.mxu0 %v249
    %678 = vmatpush.msra.mxu0 %v248
    %679 = vmatpush.msra.mxu0 %v247
    %680 = vmatpush.msra.mxu0 %v246
    %681 = vmatpush.msra.mxu0 %v245
    %682 = vmatpush.msra.mxu0 %v244
    %683 = vmatpush.msra.mxu0 %v243
    %684 = vmatpush.msra.mxu0 %v242
    %685 = vmatpush.msra.mxu0 %v241
    %686 = vmatpush.msra.mxu0 %v240
    %687 = vmatpush.msra.mxu0 %v239
    %688 = vmatpush.msra.mxu0 %v238
    %689 = vmatpush.msra.mxu0 %v237
    %690 = vmatpush.msra.mxu0 %v236
    %691 = vmatmul.f32.gmra.mxu0 %v650
    %v692 = vpop.f32.mrf.mxu0
    %v693 = vadd.f32 0.0, %v692
    %694 = vdwg.mxu0
    %695 = vmatpush.msra.mxu0 %v235
    %696 = vmatpush.msra.mxu0 %v234
    %697 = vmatpush.msra.mxu0 %v233
    %698 = vmatpush.msra.mxu0 %v232
    %699 = vmatpush.msra.mxu0 %v231
    %700 = vmatpush.msra.mxu0 %v230
    %701 = vmatpush.msra.mxu0 %v229
    %702 = vmatpush.msra.mxu0 %v228
    %703 = vmatpush.msra.mxu0 %v227
    %704 = vmatpush.msra.mxu0 %v226
    %705 = vmatpush.msra.mxu0 %v225
    %706 = vmatpush.msra.mxu0 %v224
    %707 = vmatpush.msra.mxu0 %v223
    %708 = vmatpush.msra.mxu0 %v222
    %709 = vmatpush.msra.mxu0 %v221
    %710 = vmatpush.msra.mxu0 %v220
    %711 = vmatmul.f32.gmra.mxu0 %v674
    %v712 = vpop.f32.mrf.mxu0
    %v713 = vadd.f32 %v693, %v712
    %714 = vdwg.mxu0
    %v715 = vadd.f32 %v713, %v317
    %v716 = vtanh.pop %v715
    %s717 = scalar_lea.vmem [#allocation2], 56
    %v718 = vld [vmem:[%s717] sm:$0xff]
    %719 = vmatpush.msra.mxu0 %v219
    %720 = vmatpush.msra.mxu0 %v218
    %721 = vmatpush.msra.mxu0 %v217
    %722 = vmatpush.msra.mxu0 %v216
    %723 = vmatpush.msra.mxu0 %v215
    %724 = vmatpush.msra.mxu0 %v214
    %725 = vmatpush.msra.mxu0 %v213
    %726 = vmatpush.msra.mxu0 %v212
    %727 = vmatpush.msra.mxu0 %v211
    %728 = vmatpush.msra.mxu0 %v210
    %729 = vmatpush.msra.mxu0 %v209
    %730 = vmatpush.msra.mxu0 %v208
    %731 = vmatpush.msra.mxu0 %v207
    %732 = vmatpush.msra.mxu0 %v206
    %733 = vmatpush.msra.mxu0 %v205
    %734 = vmatpush.msra.mxu0 %v204
    %735 = vmatmul.f32.gmra.mxu0 %v674
    %v736 = vpop.f32.mrf.mxu0
    %v737 = vadd.f32 0.0, %v736
    %738 = vdwg.mxu0
    %v739 = vadd.f32 %v718, %v737
    %v740 = vtanh.pop %v739
    %741 = vmatpush.msra.mxu0 %v251
    %742 = vmatpush.msra.mxu0 %v250
    %743 = vmatpush.msra.mxu0 %v249
    %744 = vmatpush.msra.mxu0 %v248
    %745 = vmatpush.msra.mxu0 %v247
    %746 = vmatpush.msra.mxu0 %v246
    %747 = vmatpush.msra.mxu0 %v245
    %748 = vmatpush.msra.mxu0 %v244
    %749 = vmatpush.msra.mxu0 %v243
    %750 = vmatpush.msra.mxu0 %v242
    %751 = vmatpush.msra.mxu0 %v241
    %752 = vmatpush.msra.mxu0 %v240
    %753 = vmatpush.msra.mxu0 %v239
    %754 = vmatpush.msra.mxu0 %v238
    %755 = vmatpush.msra.mxu0 %v237
    %756 = vmatpush.msra.mxu0 %v236
    %757 = vmatmul.f32.gmra.mxu0 %v716
    %v758 = vpop.f32.mrf.mxu0
    %v759 = vadd.f32 0.0, %v758
    %760 = vdwg.mxu0
    %761 = vmatpush.msra.mxu0 %v235
    %762 = vmatpush.msra.mxu0 %v234
    %763 = vmatpush.msra.mxu0 %v233
    %764 = vmatpush.msra.mxu0 %v232
    %765 = vmatpush.msra.mxu0 %v231
    %766 = vmatpush.msra.mxu0 %v230
    %767 = vmatpush.msra.mxu0 %v229
    %768 = vmatpush.msra.mxu0 %v228
    %769 = vmatpush.msra.mxu0 %v227
    %770 = vmatpush.msra.mxu0 %v226
    %771 = vmatpush.msra.mxu0 %v225
    %772 = vmatpush.msra.mxu0 %v224
    %773 = vmatpush.msra.mxu0 %v223
    %774 = vmatpush.msra.mxu0 %v222
    %775 = vmatpush.msra.mxu0 %v221
    %776 = vmatpush.msra.mxu0 %v220
    %777 = vmatmul.f32.gmra.mxu0 %v740
    %v778 = vpop.f32.mrf.mxu0
    %v779 = vadd.f32 %v759, %v778
    %780 = vdwg.mxu0
    %v781 = vadd.f32 %v779, %v317
    %v782 = vtanh.pop %v781
    %v783 = vld [vmem:[#allocation12] sm:$0xff]
    %v784 = vld [vmem:[#allocation12 + $0x8] sm:$0xff]
    %v785 = vld [vmem:[#allocation12 + $0x10] sm:$0xff]
    %v786 = vld [vmem:[#allocation12 + $0x18] sm:$0xff]
    %v787 = vld [vmem:[#allocation12 + $0x20] sm:$0xff]
    %v788 = vld [vmem:[#allocation12 + $0x28] sm:$0xff]
    %v789 = vld [vmem:[#allocation12 + $0x30] sm:$0xff]
    %v790 = vld [vmem:[#allocation12 + $0x38] sm:$0xff]
    %v791 = vld [vmem:[#allocation12 + $0x40] sm:$0xff]
    %v792 = vld [vmem:[#allocation12 + $0x48] sm:$0xff]
    %v793 = vld [vmem:[#allocation12 + $0x50] sm:$0xff]
    %v794 = vld [vmem:[#allocation12 + $0x58] sm:$0xff]
    %v795 = vld [vmem:[#allocation12 + $0x60] sm:$0xff]
    %v796 = vld [vmem:[#allocation12 + $0x68] sm:$0xff]
    %v797 = vld [vmem:[#allocation12 + $0x70] sm:$0xff]
    %v798 = vld [vmem:[#allocation12 + $0x78] sm:$0xff]
    %v799 = vld [vmem:[%s8] sm:$0x1]
    %v801 = vperm.slane %v799, 0
    %803 = vmatpush.msra.mxu0 %v798
    %804 = vmatpush.msra.mxu0 %v797
    %805 = vmatpush.msra.mxu0 %v796
    %806 = vmatpush.msra.mxu0 %v795
    %807 = vmatpush.msra.mxu0 %v794
    %808 = vmatpush.msra.mxu0 %v793
    %809 = vmatpush.msra.mxu0 %v792
    %810 = vmatpush.msra.mxu0 %v791
    %811 = vmatpush.msra.mxu0 %v790
    %812 = vmatpush.msra.mxu0 %v789
    %813 = vmatpush.msra.mxu0 %v788
    %814 = vmatpush.msra.mxu0 %v787
    %815 = vmatpush.msra.mxu0 %v786
    %816 = vmatpush.msra.mxu0 %v785
    %817 = vmatpush.msra.mxu0 %v784
    %818 = vmatpush.msra.mxu0 %v783
    %819 = vmatmul.f32.gmra.mxu0 %v782
    %v820 = vpop.f32.mrf.mxu0
    %v821 = vadd.f32 %v801, %v820
    %822 = vdwg.mxu0
    %823 = vmax.xlane.f32.xlu0 %v821
    %v824 = vpop.xlane.xlu0 %823
    %v825 = vsub.f32 %v821, %v824
    %v826 = vmul.f32 %v825, 1.442695
    %v827 = vpow.pop %v826
    %828 = vadd.xlane.f32.xlu0 %v827
    %v829 = vpop.xlane.xlu0 %828
    %v830 = vlog2.pop %v829
    %v831 = vmul.f32 %v830, 0.6931472
    %v832 = vsub.f32 %v825, %v831
    %833 = vst [vmem:[#allocation14] sm:$0xff] %v832
    // Predicated region
    $region62: #{tpu_custom_call.1} parent=1 // pred_check
      _
    $region63: #{tpu_custom_call.1} parent=1 // pred_check_branch
      %835 = sbr.rel (0) target = $region65
    $region64: #{tpu_custom_call.1} parent=1 // pred_region
      %837 = vsyncadd [#allocation5], 0
      %s839 = sshll.u32 [#allocation14], 4
      %s840 = int_to_ptr.vmem [resolvable:$true] %s839
      %s841 = sshll.u32 %s9, 4
      %s842 = int_to_ptr.hbm [resolvable:$true] %s841
      %844 = dma.vmem_to_hbm [thread:$0]  %s840, 128, %s842, [#allocation5]
    $region65: #{tpu_custom_call.1} parent=1 // pred_fallthru
      _
    // Predicated region
    $region66: #{tpu_custom_call.1} parent=1 // pred_check
      _
    $region67: #{tpu_custom_call.1} parent=1 // pred_check_branch
      %846 = sbr.rel (0) target = $region69
    $region68: #{tpu_custom_call.1} parent=1 // pred_region
      %848 = dma.done [#allocation5], 128
    $region69: #{tpu_custom_call.1} parent=1 // pred_fallthru
      _
    %849 = vsyncpa [#allocation4], 1
    %850 = vsyncpa [#allocation7], 1
    %851 = vsyncpa [#allocation10], 1
    %852 = vsyncpa [#allocation13], 1
    %853 = vsyncpa [#allocation5], 1

</llo_original>
